<compile_context>
chip_gen: v7x
topology: tpu7x:2x2x1
jax: 0.10.0
libtpu: 0.0.40
codegen_flags: <defaults>
</compile_context>

<pallas_src>
import functools

import jax
import jax.numpy as jnp
from jax import lax
from jax.experimental import pallas as pl
from jax.experimental.pallas import tpu as pltpu

LANE = 128
VMEM_LIMIT = 32 * 1024 * 1024          # fits v5e/v6e/v7x scoped VMEM
XW_RESIDENT_BYTES = 8 * 1024 * 1024    # keep xw resident in VMEM below this


def _round_up(v, m):
    return (v + m - 1) // m * m


# ----------------------------------------------------------------------------
# Kernel 1: dense transform  xw1 = x @ W1   (row-tiled, bf16 in/out, f32 acc)
# ----------------------------------------------------------------------------
def _dense_kernel(x_ref, w_ref, o_ref):
    o_ref[...] = jnp.dot(x_ref[...], w_ref[...],
                         preferred_element_type=jnp.float32).astype(o_ref.dtype)


def _dense_transform(x_in, w_in, tile_m):
    m, k = x_in.shape
    nout = w_in.shape[1]
    return pl.pallas_call(
        _dense_kernel,
        out_shape=jax.ShapeDtypeStruct((m, nout), jnp.bfloat16),
        grid_spec=pltpu.PrefetchScalarGridSpec(
            num_scalar_prefetch=0,
            grid=(m // tile_m,),
            in_specs=[pl.BlockSpec((tile_m, k), lambda i: (i, 0)),
                      pl.BlockSpec((k, nout), lambda i: (0, 0))],
            out_specs=pl.BlockSpec((tile_m, nout), lambda i: (i, 0))),
        compiler_params=pltpu.CompilerParams(
            dimension_semantics=("parallel",),
            vmem_limit_bytes=VMEM_LIMIT),
    )(x_in, w_in)


# ----------------------------------------------------------------------------
# Kernel 2 (fused GCN layer 1 + layer-2 dense transform):
#   xw2 = relu(A_hat @ xw1 + b1) @ W2
#   grid = (row tiles [parallel], K tiles over N [arbitrary, last])
#   f32 VMEM accumulator, bf16 MXU inputs, bf16 output.
# ----------------------------------------------------------------------------
def _xw_read(xw_ref, xw_resident, tile_k):
    if xw_resident:
        off = pl.multiple_of(pl.program_id(1) * tile_k, tile_k)
        return xw_ref[pl.ds(off, tile_k), :]
    return xw_ref[...]


def _agg1_kernel(a_ref, xw_ref, b1_ref, w2_ref, xw2_ref, acc_ref, *,
                 xw_resident, tile_k):
    k = pl.program_id(1)

    @pl.when(k == 0)
    def _():
        acc_ref[...] = jnp.zeros_like(acc_ref)

    acc_ref[...] += jnp.dot(a_ref[...], _xw_read(xw_ref, xw_resident, tile_k),
                            preferred_element_type=jnp.float32)

    @pl.when(k == pl.num_programs(1) - 1)
    def _():
        h1 = jnp.maximum(acc_ref[...] + b1_ref[...], 0.0).astype(jnp.bfloat16)
        xw2_ref[...] = jnp.dot(
            h1, w2_ref[...],
            preferred_element_type=jnp.float32).astype(xw2_ref.dtype)


def _xw_spec(n_pad, h_pad, tile_k, resident):
    if resident:
        return pl.BlockSpec((n_pad, h_pad), lambda i, k: (0, 0))
    return pl.BlockSpec((tile_k, h_pad), lambda i, k: (k, 0))


def _agg_layer1(a_hat, xw1, b1_pad, w2_pad, tile_m, tile_k, xw_resident):
    n_pad, h_pad = xw1.shape
    return pl.pallas_call(
        functools.partial(_agg1_kernel, xw_resident=xw_resident, tile_k=tile_k),
        out_shape=jax.ShapeDtypeStruct((n_pad, h_pad), jnp.bfloat16),
        grid_spec=pltpu.PrefetchScalarGridSpec(
            num_scalar_prefetch=0,
            grid=(n_pad // tile_m, n_pad // tile_k),
            in_specs=[pl.BlockSpec((tile_m, tile_k), lambda i, k: (i, k)),
                      _xw_spec(n_pad, h_pad, tile_k, xw_resident),
                      pl.BlockSpec((1, h_pad), lambda i, k: (0, 0)),
                      pl.BlockSpec((h_pad, h_pad), lambda i, k: (0, 0))],
            out_specs=pl.BlockSpec((tile_m, h_pad), lambda i, k: (i, 0)),
            scratch_shapes=[pltpu.VMEM((tile_m, h_pad), jnp.float32)]),
        compiler_params=pltpu.CompilerParams(
            dimension_semantics=("parallel", "arbitrary"),
            vmem_limit_bytes=VMEM_LIMIT),
    )(a_hat, xw1, b1_pad, w2_pad)


# ----------------------------------------------------------------------------
# Kernel 3 (fused GCN layer 2 + edge-MLP first layer):
#   h2 = A_hat @ xw2 + b2
#   P  = h2 @ Wl1_src + bl1   (bf16 out)
#   Q  = h2 @ Wl1_dst         (bf16 out)
# ----------------------------------------------------------------------------
def _agg2_kernel(a_ref, xw_ref, b2_ref, wl1s_ref, wl1d_ref, bl1_ref,
                 p_ref, q_ref, acc_ref, *, xw_resident, tile_k):
    k = pl.program_id(1)

    @pl.when(k == 0)
    def _():
        acc_ref[...] = jnp.zeros_like(acc_ref)

    acc_ref[...] += jnp.dot(a_ref[...], _xw_read(xw_ref, xw_resident, tile_k),
                            preferred_element_type=jnp.float32)

    @pl.when(k == pl.num_programs(1) - 1)
    def _():
        h2 = (acc_ref[...] + b2_ref[...]).astype(jnp.bfloat16)
        p_ref[...] = (jnp.dot(h2, wl1s_ref[...],
                              preferred_element_type=jnp.float32)
                      + bl1_ref[...]).astype(p_ref.dtype)
        q_ref[...] = jnp.dot(h2, wl1d_ref[...],
                             preferred_element_type=jnp.float32
                             ).astype(q_ref.dtype)


def _agg_layer2(a_hat, xw2, b2_pad, wl1s_pad, wl1d_pad, bl1_pad,
                tile_m, tile_k, xw_resident):
    n_pad, h_pad = xw2.shape
    return pl.pallas_call(
        functools.partial(_agg2_kernel, xw_resident=xw_resident, tile_k=tile_k),
        out_shape=(jax.ShapeDtypeStruct((n_pad, h_pad), jnp.bfloat16),
                   jax.ShapeDtypeStruct((n_pad, h_pad), jnp.bfloat16)),
        grid_spec=pltpu.PrefetchScalarGridSpec(
            num_scalar_prefetch=0,
            grid=(n_pad // tile_m, n_pad // tile_k),
            in_specs=[pl.BlockSpec((tile_m, tile_k), lambda i, k: (i, k)),
                      _xw_spec(n_pad, h_pad, tile_k, xw_resident),
                      pl.BlockSpec((1, h_pad), lambda i, k: (0, 0)),
                      pl.BlockSpec((h_pad, h_pad), lambda i, k: (0, 0)),
                      pl.BlockSpec((h_pad, h_pad), lambda i, k: (0, 0)),
                      pl.BlockSpec((1, h_pad), lambda i, k: (0, 0))],
            out_specs=(pl.BlockSpec((tile_m, h_pad), lambda i, k: (i, 0)),
                       pl.BlockSpec((tile_m, h_pad), lambda i, k: (i, 0))),
            scratch_shapes=[pltpu.VMEM((tile_m, h_pad), jnp.float32)]),
        compiler_params=pltpu.CompilerParams(
            dimension_semantics=("parallel", "arbitrary"),
            vmem_limit_bytes=VMEM_LIMIT),
    )(a_hat, xw2, b2_pad, wl1s_pad, wl1d_pad, bl1_pad)


# ----------------------------------------------------------------------------
# Kernel 4: edge scorer with in-kernel gather.
#   src/dst indices arrive via scalar prefetch (SMEM).  Rows of the bf16
#   VMEM-resident P/Q are gathered (unrolled by 8) into bf16 scratch, then
#   score = relu(P[src] + Q[dst]) @ wl2 + bl2.  Output is a lane-dense
#   (te, 128) f32 tile whose column 0 carries the score.
# ----------------------------------------------------------------------------
def _edge_kernel(src_ref, dst_ref, p_ref, q_ref, wl2_ref, bl2_ref, out_ref,
                 sbuf, dbuf, *, te):
    base = pl.program_id(0) * te

    def gather(j, carry):
        s = src_ref[base + j]
        d = dst_ref[base + j]
        sbuf[pl.ds(j, 1), :] = p_ref[pl.ds(s, 1), :]
        dbuf[pl.ds(j, 1), :] = q_ref[pl.ds(d, 1), :]
        return carry

    lax.fori_loop(0, te, gather, 0, unroll=8)

    z = jnp.maximum(sbuf[...].astype(jnp.float32)
                    + dbuf[...].astype(jnp.float32), 0.0)
    out_ref[...] = (jnp.dot(z.astype(jnp.bfloat16), wl2_ref[...],
                            preferred_element_type=jnp.float32)
                    + bl2_ref[...])


def _edge_scores(src_pad, dst_pad, p_arr, q_arr, wl2_pad, bl2_pad, te):
    n_pad, h_pad = p_arr.shape
    e_pad = src_pad.shape[0]
    # TODO(synk): for very large graphs, pass P/Q with memory_space=pl.ANY and
    # DMA-gather rows (double-buffered) instead of keeping them VMEM-resident,
    # and prefetch per-tile index chunks instead of the full SMEM edge list.
    return pl.pallas_call(
        functools.partial(_edge_kernel, te=te),
        out_shape=jax.ShapeDtypeStruct((e_pad, LANE), jnp.float32),
        grid_spec=pltpu.PrefetchScalarGridSpec(
            num_scalar_prefetch=2,
            grid=(e_pad // te,),
            in_specs=[pl.BlockSpec((n_pad, h_pad), lambda t, s, d: (0, 0)),
                      pl.BlockSpec((n_pad, h_pad), lambda t, s, d: (0, 0)),
                      pl.BlockSpec((h_pad, LANE), lambda t, s, d: (0, 0)),
                      pl.BlockSpec((1, LANE), lambda t, s, d: (0, 0))],
            out_specs=pl.BlockSpec((te, LANE), lambda t, s, d: (t, 0)),
            scratch_shapes=[pltpu.VMEM((te, h_pad), jnp.bfloat16),
                            pltpu.VMEM((te, h_pad), jnp.bfloat16)]),
        compiler_params=pltpu.CompilerParams(
            dimension_semantics=("parallel",),
            vmem_limit_bytes=VMEM_LIMIT),
    )(src_pad, dst_pad, p_arr, q_arr, wl2_pad, bl2_pad)


# ----------------------------------------------------------------------------
# Wrapper
# ----------------------------------------------------------------------------
def gcn_link_predictor(x, edge_index, params):
    """x: (N, Cin) f32 node features; edge_index: (2, E) int32."""
    w1, b1, w2, b2, wl1, bl1, wl2, bl2 = params
    n, c = x.shape
    e = edge_index.shape[1]
    h = w1.shape[1]
    src = edge_index[0].astype(jnp.int32)
    dst = edge_index[1].astype(jnp.int32)

    c_pad = _round_up(c, LANE)
    h_pad = _round_up(h, LANE)
    n_pad128 = _round_up(n, LANE)
    tile_n = min(1024, n_pad128)
    n_pad = _round_up(n_pad128, tile_n)
    te = min(256, _round_up(e, 8))
    e_pad = _round_up(e, te)
    xw_resident = n_pad * h_pad * 2 <= XW_RESIDENT_BYTES

    # --- JAX glue: padded dense normalized adjacency D^-1/2 (A+I) D^-1/2 -----
    # TODO(synk): for large sparse graphs replace the O(N^2) dense A_hat with an
    # edge-list segment aggregation, streaming a 0/1 int8 adjacency with the
    # D^-1/2 scaling factored out of the kernel.
    loop = jnp.arange(n, dtype=jnp.int32)
    adj = jnp.zeros((n_pad, n_pad), jnp.float32).at[
        jnp.concatenate([dst, loop]), jnp.concatenate([src, loop])].add(1.0)
    deg = adj.sum(axis=1)
    dinv = jnp.where(deg > 0, lax.rsqrt(deg), 0.0)
    a_hat = (dinv[:, None] * adj * dinv[None, :]).astype(jnp.bfloat16)

    # --- bf16 lane-padded MXU operands; f32 biases (epilogues stay f32) -------
    x_pad = jnp.zeros((n_pad, c_pad), jnp.bfloat16).at[:n, :c].set(
        x.astype(jnp.bfloat16))
    w1_pad = jnp.zeros((c_pad, h_pad), jnp.bfloat16).at[:c, :h].set(
        w1.astype(jnp.bfloat16))
    b1_pad = jnp.zeros((1, h_pad), jnp.float32).at[0, :h].set(b1)
    w2_pad = jnp.zeros((h_pad, h_pad), jnp.bfloat16).at[:h, :h].set(
        w2.astype(jnp.bfloat16))
    b2_pad = jnp.zeros((1, h_pad), jnp.float32).at[0, :h].set(b2)
    wl1s_pad = jnp.zeros((h_pad, h_pad), jnp.bfloat16).at[:h, :h].set(
        wl1[:h].astype(jnp.bfloat16))
    wl1d_pad = jnp.zeros((h_pad, h_pad), jnp.bfloat16).at[:h, :h].set(
        wl1[h:].astype(jnp.bfloat16))
    bl1_pad = jnp.zeros((1, h_pad), jnp.float32).at[0, :h].set(bl1)
    wl2_pad = jnp.zeros((h_pad, LANE), jnp.bfloat16).at[:h, 0].set(
        wl2[:, 0].astype(jnp.bfloat16))
    bl2_pad = jnp.zeros((1, LANE), jnp.float32).at[0, 0].set(bl2[0])

    src_pad = jnp.zeros((e_pad,), jnp.int32).at[:e].set(src)
    dst_pad = jnp.zeros((e_pad,), jnp.int32).at[:e].set(dst)

    # --- GCN layer 1 dense transform: xw1 = x @ W1 ----------------------------
    xw1 = _dense_transform(x_pad, w1_pad, tile_n)                    # bf16

    # --- Fused layer-1 agg + layer-2 transform: xw2 = relu(A@xw1 + b1) @ W2 ---
    xw2 = _agg_layer1(a_hat, xw1, b1_pad, w2_pad, tile_n, tile_n,
                      xw_resident)                                   # bf16

    # --- Fused layer-2 agg + edge-MLP layer 1: P = h2@Wl1s + bl1, Q = h2@Wl1d -
    p_arr, q_arr = _agg_layer2(a_hat, xw2, b2_pad, wl1s_pad, wl1d_pad,
                               bl1_pad, tile_n, tile_n, xw_resident)  # bf16

    # --- Edge scorer: relu(P[src] + Q[dst]) @ wl2 + bl2 ------------------------
    scores = _edge_scores(src_pad, dst_pad, p_arr, q_arr, wl2_pad, bl2_pad, te)

    return scores[:e, 0]


# ----------------------------------------------------------------------------
# Pure-JAX reference (mirrors the PyTorch/PyG forward, f32 throughout)
# ----------------------------------------------------------------------------
def _reference(x, edge_index, params):
    w1, b1, w2, b2, wl1, bl1, wl2, bl2 = params
    n = x.shape[0]
    src, dst = edge_index[0], edge_index[1]
    loop = jnp.arange(n, dtype=edge_index.dtype)
    adj = jnp.zeros((n, n), jnp.float32).at[
        jnp.concatenate([dst, loop]), jnp.concatenate([src, loop])].add(1.0)
    deg = adj.sum(axis=1)
    dinv = jnp.where(deg > 0, lax.rsqrt(deg), 0.0)
    a_hat = dinv[:, None] * adj * dinv[None, :]

    h1 = jax.nn.relu(a_hat @ (x @ w1) + b1)
    h2 = a_hat @ (h1 @ w2) + b2
    ef = jnp.concatenate([h2[src], h2[dst]], axis=1)
    z = jax.nn.relu(ef @ wl1 + bl1)
    return (z @ wl2 + bl2).reshape(-1)


def init_params(key, in_channels, hidden_channels):
    ks = jax.random.split(key, 4)
    scale = 0.1
    w1 = scale * jax.random.normal(ks[0], (in_channels, hidden_channels), jnp.float32)
    b1 = jnp.zeros((hidden_channels,), jnp.float32)
    w2 = scale * jax.random.normal(ks[1], (hidden_channels, hidden_channels), jnp.float32)
    b2 = jnp.zeros((hidden_channels,), jnp.float32)
    wl1 = scale * jax.random.normal(ks[2], (2 * hidden_channels, hidden_channels), jnp.float32)
    bl1 = jnp.full((hidden_channels,), 0.01, jnp.float32)
    wl2 = scale * jax.random.normal(ks[3], (hidden_channels, 1), jnp.float32)
    bl2 = jnp.full((1,), 0.02, jnp.float32)
    return (w1, b1, w2, b2, wl1, bl1, wl2, bl2)


if __name__ == "__main__":
    key = jax.random.PRNGKey(0)
    k_x, k_e, k_p = jax.random.split(key, 3)

    num_nodes = 16
    in_channels = 8
    hidden_channels = 32
    num_edges = 24

    x = jax.random.normal(k_x, (num_nodes, in_channels), jnp.float32)
    edge_index = jax.random.randint(k_e, (2, num_edges), 0, num_nodes, jnp.int32)
    params = init_params(k_p, in_channels, hidden_channels)

    out = jax.block_until_ready(gcn_link_predictor(x, edge_index, params))
    ref = jax.block_until_ready(_reference(x, edge_index, params))

    assert out.shape == (num_edges,)
    # bf16 MXU operands / bf16 intermediates with f32 accumulation -> loosened tol.
    assert jnp.allclose(out, ref, atol=3e-2, rtol=3e-2), (out, ref)

    print("KERNEL_OK")
</pallas_src>

<mosaic_0001>
module attributes {stable_mosaic.version = 11 : i64} {
  func.func @_dense_kernel(%arg0: i32, %arg1: memref<128x128xbf16, #tpu.memory_space<vmem>>, %arg2: memref<128x128xbf16, #tpu.memory_space<vmem>>, %arg3: memref<128x128xbf16, #tpu.memory_space<vmem>>) attributes {dimension_semantics = [#tpu.dimension_semantics<parallel>], iteration_bounds = array<i64: 1>, scalar_prefetch = 0 : i64, scratch_operands = 0 : i64, tpu.core_type = #tpu.core_type<tc>, window_params = [{transform_indices = @transform_0, window_bounds = array<i64: 128, 128>}, {pipeline_mode = #tpu.pipeline_mode<synchronous>, transform_indices = @transform_1, window_bounds = array<i64: 128, 128>}, {transform_indices = @transform_2, window_bounds = array<i64: 128, 128>}]} {
    %c0 = arith.constant 0 : index
    %c0_0 = arith.constant 0 : index
    %0 = vector.load %arg1[%c0, %c0_0] : memref<128x128xbf16, #tpu.memory_space<vmem>>, vector<128x128xbf16>
    %c0_1 = arith.constant 0 : index
    %c0_2 = arith.constant 0 : index
    %1 = vector.load %arg2[%c0_1, %c0_2] : memref<128x128xbf16, #tpu.memory_space<vmem>>, vector<128x128xbf16>
    %cst = arith.constant dense<0.000000e+00> : vector<128x128xf32>
    %2 = tpu.matmul %0, %1, %cst {dimension_numbers = #tpu.dot_dimension_numbers<[1], [0], [0], [1], [0, 0, 1, 1], [], []>} : vector<128x128xbf16>, vector<128x128xbf16>, vector<128x128xf32> -> vector<128x128xf32>
    %3 = arith.truncf %2 : vector<128x128xf32> to vector<128x128xbf16>
    %c0_3 = arith.constant 0 : index
    %c0_4 = arith.constant 0 : index
    %4 = vector.load %arg3[%c0_3, %c0_4] : memref<128x128xbf16, #tpu.memory_space<vmem>>, vector<128x128xbf16>
    tpu.vector_store %arg3[%c0_3, %c0_4], %3 {strides = array<i32>} : memref<128x128xbf16, #tpu.memory_space<vmem>>, vector<128x128xbf16>,
    return
  }
  func.func @transform_0(%arg0: i32) -> (i32, i32) {
    %c0_i32 = arith.constant 0 : i32
    %c0_i32_0 = arith.constant 0 : i32
    return %arg0, %c0_i32 : i32, i32
  }
  func.func @transform_1(%arg0: i32) -> (i32, i32) {
    %c0_i32 = arith.constant 0 : i32
    %c0_i32_0 = arith.constant 0 : i32
    %c0_i32_1 = arith.constant 0 : i32
    return %c0_i32, %c0_i32_0 : i32, i32
  }
  func.func @transform_2(%arg0: i32) -> (i32, i32) {
    %c0_i32 = arith.constant 0 : i32
    %c0_i32_0 = arith.constant 0 : i32
    return %arg0, %c0_i32 : i32, i32
  }
}

</mosaic_0001>

<llo_original>
// kernel: tpu_custom_call.1
$region0: #{tpu_custom_call.1}
  #allocation0 [shape = 'u32[]', space=smem, size = 0x4, offset = 0x4, fixed_abs, tag = 'smem constant byte address 0x4 - core index']
  #allocation1 [shape = 'u32[144,128]{1,0:T(1,128)}', space=vmem, size = 0x12000, scoped, tag = 'internal scratch']
  %s0 = inlined_call_operand.hbm [shape: bf16[128,128], index: 0, kind: input, shape index: {}]
  %s1 = inlined_call_operand.hbm [shape: bf16[128,128], index: 1, kind: input, shape index: {}]
  %s2 = inlined_call_operand.hbm [shape: bf16[128,128], index: 2, kind: output, shape index: {}]
  %s3 = sld [smem:[#allocation0]]
  $region26: #{tpu_custom_call.1} parent=0
    _
  %s5 = ssub.s32 1, %s3
  %s6 = scalar_select 0, %s5, %s3
  $region1: #{tpu_custom_call.1} parent=0
    #allocation2 [shape = 'u8[32768]{0}', space=vmem, size = 0x8000, scoped, tag = 'input window, operand 0, single buffered']
    #allocation3 [shape = 's32[1]{0}', space=sflag, size = 0x4, scoped, tag = 'scoped memory for tpu_custom_call.1']
    #allocation4 [shape = 's32[1]{0}', space=sflag, size = 0x4, scoped, tag = 'scoped memory for tpu_custom_call.1']
    #allocation5 [shape = 'u8[32768]{0}', space=vmem, size = 0x8000, scoped, tag = 'input window, operand 1, single buffered']
    #allocation6 [shape = 's32[1]{0}', space=sflag, size = 0x4, scoped, tag = 'scoped memory for tpu_custom_call.1']
    #allocation7 [shape = 'u8[32768]{0}', space=vmem, size = 0x8000, scoped, tag = 'output window, operand 0, single buffered']
    %7 = vsyncpa [#allocation3], 0
    %8 = vsyncpa [#allocation6], 0
    %9 = vsyncpa [#allocation4], 0
    // Predicated region
    $region2: #{tpu_custom_call.1} parent=1 // pred_check
      _
    $region3: #{tpu_custom_call.1} parent=1 // pred_check_branch
      %11 = sbr.rel (0) target = $region5
    $region4: #{tpu_custom_call.1} parent=1 // pred_region
      %s13 = ssub.s32 1024, 1024
      %14 = vsyncadd [#allocation3], %s13
      %s15 = sshll.u32 [#allocation2], 4
      %s16 = int_to_ptr.vmem [resolvable:$true] %s15
      %21 = dma.hbm_to_vmem [thread:$0]  %s0, 1024, %s16, [#allocation3], 64, 64, 4
    $region5: #{tpu_custom_call.1} parent=1 // pred_fallthru
      _
    // Predicated region
    $region6: #{tpu_custom_call.1} parent=1 // pred_check
      _
    $region7: #{tpu_custom_call.1} parent=1 // pred_check_branch
      %23 = sbr.rel (0) target = $region9
    $region8: #{tpu_custom_call.1} parent=1 // pred_region
      %s25 = ssub.s32 1024, 1024
      %26 = vsyncadd [#allocation6], %s25
      %s27 = sshll.u32 [#allocation5], 4
      %s28 = int_to_ptr.vmem [resolvable:$true] %s27
      %33 = dma.hbm_to_vmem [thread:$0]  %s1, 1024, %s28, [#allocation6], 64, 64, 4
    $region9: #{tpu_custom_call.1} parent=1 // pred_fallthru
      _
    // Predicated region
    $region10: #{tpu_custom_call.1} parent=1 // pred_check
      _
    $region11: #{tpu_custom_call.1} parent=1 // pred_check_branch
      %35 = sbr.rel (0) target = $region13
    $region12: #{tpu_custom_call.1} parent=1 // pred_region
      %36 = dma.done [#allocation3], 1024
    $region13: #{tpu_custom_call.1} parent=1 // pred_fallthru
      _
    // Predicated region
    $region14: #{tpu_custom_call.1} parent=1 // pred_check
      _
    $region15: #{tpu_custom_call.1} parent=1 // pred_check_branch
      %38 = sbr.rel (0) target = $region17
    $region16: #{tpu_custom_call.1} parent=1 // pred_region
      %39 = dma.done [#allocation6], 1024
    $region17: #{tpu_custom_call.1} parent=1 // pred_fallthru
      _
    %v41 = vld [vmem:[#allocation2] sm:$0xf]
    %v42 = vld [vmem:[#allocation2 + $0x4] sm:$0xf]
    %v43 = vld [vmem:[#allocation2 + $0x8] sm:$0xf]
    %v44 = vld [vmem:[#allocation2 + $0xc] sm:$0xf]
    %v45 = vld [vmem:[#allocation2 + $0x10] sm:$0xf]
    %v46 = vld [vmem:[#allocation2 + $0x14] sm:$0xf]
    %v47 = vld [vmem:[#allocation2 + $0x18] sm:$0xf]
    %v48 = vld [vmem:[#allocation2 + $0x1c] sm:$0xf]
    %v49 = vld [vmem:[#allocation2 + $0x20] sm:$0xf]
    %v50 = vld [vmem:[#allocation2 + $0x24] sm:$0xf]
    %v51 = vld [vmem:[#allocation2 + $0x28] sm:$0xf]
    %v52 = vld [vmem:[#allocation2 + $0x2c] sm:$0xf]
    %v53 = vld [vmem:[#allocation2 + $0x30] sm:$0xf]
    %v54 = vld [vmem:[#allocation2 + $0x34] sm:$0xf]
    %v55 = vld [vmem:[#allocation2 + $0x38] sm:$0xf]
    %v56 = vld [vmem:[#allocation2 + $0x3c] sm:$0xf]
    %v57 = vld [vmem:[#allocation5] sm:$0xf]
    %v58 = vld [vmem:[#allocation5 + $0x4] sm:$0xf]
    %v59 = vld [vmem:[#allocation5 + $0x8] sm:$0xf]
    %v60 = vld [vmem:[#allocation5 + $0xc] sm:$0xf]
    %v61 = vld [vmem:[#allocation5 + $0x10] sm:$0xf]
    %v62 = vld [vmem:[#allocation5 + $0x14] sm:$0xf]
    %v63 = vld [vmem:[#allocation5 + $0x18] sm:$0xf]
    %v64 = vld [vmem:[#allocation5 + $0x1c] sm:$0xf]
    %v65 = vld [vmem:[#allocation5 + $0x20] sm:$0xf]
    %v66 = vld [vmem:[#allocation5 + $0x24] sm:$0xf]
    %v67 = vld [vmem:[#allocation5 + $0x28] sm:$0xf]
    %v68 = vld [vmem:[#allocation5 + $0x2c] sm:$0xf]
    %v69 = vld [vmem:[#allocation5 + $0x30] sm:$0xf]
    %v70 = vld [vmem:[#allocation5 + $0x34] sm:$0xf]
    %v71 = vld [vmem:[#allocation5 + $0x38] sm:$0xf]
    %v72 = vld [vmem:[#allocation5 + $0x3c] sm:$0xf]
    %v89 = vunpack.c.l.b16 %v41
    %v90 = vunpack.c.l.b16 %v42
    %v91 = vunpack.c.l.b16 %v43
    %v92 = vunpack.c.l.b16 %v44
    %v93 = vunpack.c.l.b16 %v45
    %v94 = vunpack.c.l.b16 %v46
    %v95 = vunpack.c.l.b16 %v47
    %v96 = vunpack.c.l.b16 %v48
    %v97 = vunpack.c.l.b16 %v49
    %v98 = vunpack.c.l.b16 %v50
    %v99 = vunpack.c.l.b16 %v51
    %v100 = vunpack.c.l.b16 %v52
    %v101 = vunpack.c.l.b16 %v53
    %v102 = vunpack.c.l.b16 %v54
    %v103 = vunpack.c.l.b16 %v55
    %v104 = vunpack.c.l.b16 %v56
    %v105 = vpack.c.b16 %v90, %v89
    %v106 = vpack.c.b16 %v92, %v91
    %v107 = vpack.c.b16 %v94, %v93
    %v108 = vpack.c.b16 %v96, %v95
    %v109 = vpack.c.b16 %v98, %v97
    %v110 = vpack.c.b16 %v100, %v99
    %v111 = vpack.c.b16 %v102, %v101
    %v112 = vpack.c.b16 %v104, %v103
    %v137 = vunpack.c.l.b16 %v57
    %v138 = vunpack.c.l.b16 %v58
    %v139 = vunpack.c.l.b16 %v59
    %v140 = vunpack.c.l.b16 %v60
    %v141 = vunpack.c.l.b16 %v61
    %v142 = vunpack.c.l.b16 %v62
    %v143 = vunpack.c.l.b16 %v63
    %v144 = vunpack.c.l.b16 %v64
    %v145 = vunpack.c.l.b16 %v65
    %v146 = vunpack.c.l.b16 %v66
    %v147 = vunpack.c.l.b16 %v67
    %v148 = vunpack.c.l.b16 %v68
    %v149 = vunpack.c.l.b16 %v69
    %v150 = vunpack.c.l.b16 %v70
    %v151 = vunpack.c.l.b16 %v71
    %v152 = vunpack.c.l.b16 %v72
    %v153 = vpack.c.b16 %v138, %v137
    %v154 = vpack.c.b16 %v140, %v139
    %v155 = vpack.c.b16 %v142, %v141
    %v156 = vpack.c.b16 %v144, %v143
    %v157 = vpack.c.b16 %v146, %v145
    %v158 = vpack.c.b16 %v148, %v147
    %v159 = vpack.c.b16 %v150, %v149
    %v160 = vpack.c.b16 %v152, %v151
    %169 = vmatprep.subr.bf16.mxu0 0
    %170 = vmatpush1.bf16.msra.mxu0 %v153
    %171 = vmatprep.subr.bf16.mxu0 0
    %172 = vmatpush1.bf16.msra.mxu0 %v154
    %173 = vmatprep.subr.bf16.mxu0 0
    %174 = vmatpush1.bf16.msra.mxu0 %v155
    %175 = vmatprep.subr.bf16.mxu0 0
    %176 = vmatpush1.bf16.msra.mxu0 %v156
    %177 = vmatprep.subr.bf16.mxu0 0
    %178 = vmatpush1.bf16.msra.mxu0 %v157
    %179 = vmatprep.subr.bf16.mxu0 0
    %180 = vmatpush1.bf16.msra.mxu0 %v158
    %181 = vmatprep.subr.bf16.mxu0 0
    %182 = vmatpush1.bf16.msra.mxu0 %v159
    %183 = vmatprep.subr.bf16.mxu0 0
    %184 = vmatpush1.bf16.msra.mxu0 %v160
    %185 = vmatprep.subr.bf16.mxu0 0
    %186 = vmatpush1.bf16.msra.mxu0 0
    %187 = vmatprep.subr.bf16.mxu0 0
    %188 = vmatpush1.bf16.msra.mxu0 0
    %189 = vmatprep.subr.bf16.mxu0 0
    %190 = vmatpush1.bf16.msra.mxu0 0
    %191 = vmatprep.subr.bf16.mxu0 0
    %192 = vmatpush1.bf16.msra.mxu0 0
    %193 = vmatprep.subr.bf16.mxu0 0
    %194 = vmatpush1.bf16.msra.mxu0 0
    %195 = vmatprep.subr.bf16.mxu0 0
    %196 = vmatpush1.bf16.msra.mxu0 0
    %197 = vmatprep.subr.bf16.mxu0 0
    %198 = vmatpush1.bf16.msra.mxu0 0
    %199 = vmatprep.subr.bf16.mxu0 0
    %200 = vmatpush1.bf16.msra.mxu0 0
    %201 = vmatprep.mubr.bf16.mxu0 0
    %202 = vmatmul.mubr.bf16.gmra.mrb[0].mxu0 %v105
    %v203 = vpop.f32.mrb[0].mxu0
    %v204 = vadd.f32 0.0, %v203
    %v205 = vpop.f32.mrb[0].mxu0
    %v206 = vpop.f32.mrb[0].mxu0
    %v207 = vadd.f32 0.0, %v206
    %v208 = vpop.f32.mrb[0].mxu0
    %209 = vmatprep.mubr.bf16.mxu0 0
    %210 = vmatmul.mubr.bf16.gmra.mrb[0].mxu0 %v106
    %v211 = vpop.f32.mrb[0].mxu0
    %v212 = vadd.f32 0.0, %v211
    %v213 = vpop.f32.mrb[0].mxu0
    %v214 = vpop.f32.mrb[0].mxu0
    %v215 = vadd.f32 0.0, %v214
    %v216 = vpop.f32.mrb[0].mxu0
    %217 = vmatprep.mubr.bf16.mxu0 0
    %218 = vmatmul.mubr.bf16.gmra.mrb[0].mxu0 %v107
    %v219 = vpop.f32.mrb[0].mxu0
    %v220 = vadd.f32 0.0, %v219
    %v221 = vpop.f32.mrb[0].mxu0
    %v222 = vpop.f32.mrb[0].mxu0
    %v223 = vadd.f32 0.0, %v222
    %v224 = vpop.f32.mrb[0].mxu0
    %225 = vmatprep.mubr.bf16.mxu0 0
    %226 = vmatmul.mubr.bf16.gmra.mrb[0].mxu0 %v108
    %v227 = vpop.f32.mrb[0].mxu0
    %v228 = vadd.f32 0.0, %v227
    %v229 = vpop.f32.mrb[0].mxu0
    %v230 = vpop.f32.mrb[0].mxu0
    %v231 = vadd.f32 0.0, %v230
    %v232 = vpop.f32.mrb[0].mxu0
    %233 = vmatprep.mubr.bf16.mxu0 0
    %234 = vmatmul.mubr.bf16.gmra.mrb[0].mxu0 %v109
    %v235 = vpop.f32.mrb[0].mxu0
    %v236 = vadd.f32 0.0, %v235
    %v237 = vpop.f32.mrb[0].mxu0
    %v238 = vpop.f32.mrb[0].mxu0
    %v239 = vadd.f32 0.0, %v238
    %v240 = vpop.f32.mrb[0].mxu0
    %241 = vmatprep.mubr.bf16.mxu0 0
    %242 = vmatmul.mubr.bf16.gmra.mrb[0].mxu0 %v110
    %v243 = vpop.f32.mrb[0].mxu0
    %v244 = vadd.f32 0.0, %v243
    %v245 = vpop.f32.mrb[0].mxu0
    %v246 = vpop.f32.mrb[0].mxu0
    %v247 = vadd.f32 0.0, %v246
    %v248 = vpop.f32.mrb[0].mxu0
    %249 = vmatprep.mubr.bf16.mxu0 0
    %250 = vmatmul.mubr.bf16.gmra.mrb[0].mxu0 %v111
    %v251 = vpop.f32.mrb[0].mxu0
    %v252 = vadd.f32 0.0, %v251
    %v253 = vpop.f32.mrb[0].mxu0
    %v254 = vpop.f32.mrb[0].mxu0
    %v255 = vadd.f32 0.0, %v254
    %v256 = vpop.f32.mrb[0].mxu0
    %257 = vmatprep.mubr.bf16.mxu0 0
    %258 = vmatmul.mubr.bf16.gmra.mrb[0].mxu0 %v112
    %v259 = vpop.f32.mrb[0].mxu0
    %v260 = vadd.f32 0.0, %v259
    %v261 = vpop.f32.mrb[0].mxu0
    %v262 = vpop.f32.mrb[0].mxu0
    %v263 = vadd.f32 0.0, %v262
    %v264 = vpop.f32.mrb[0].mxu0
    %265 = vdwg.mxu0
    %v266 = vpack.c.bf16 %v207, %v204
    %v267 = vpack.c.bf16 %v215, %v212
    %v268 = vpack.c.bf16 %v223, %v220
    %v269 = vpack.c.bf16 %v231, %v228
    %v270 = vpack.c.bf16 %v239, %v236
    %v271 = vpack.c.bf16 %v247, %v244
    %v272 = vpack.c.bf16 %v255, %v252
    %v273 = vpack.c.bf16 %v263, %v260
    %v282 = vunpack.c.l.b16 %v266
    %v283 = vunpack.c.h.b16 %v266
    %v284 = vunpack.c.l.b16 %v267
    %v285 = vunpack.c.h.b16 %v267
    %v286 = vunpack.c.l.b16 %v268
    %v287 = vunpack.c.h.b16 %v268
    %v288 = vunpack.c.l.b16 %v269
    %v289 = vunpack.c.h.b16 %v269
    %v290 = vunpack.c.l.b16 %v270
    %v291 = vunpack.c.h.b16 %v270
    %v292 = vunpack.c.l.b16 %v271
    %v293 = vunpack.c.h.b16 %v271
    %v294 = vunpack.c.l.b16 %v272
    %v295 = vunpack.c.h.b16 %v272
    %v296 = vunpack.c.l.b16 %v273
    %v297 = vunpack.c.h.b16 %v273
    %v298 = vpack.c.b16 %v282, %v282
    %v299 = vpack.c.b16 %v283, %v283
    %v300 = vpack.c.b16 %v284, %v284
    %v301 = vpack.c.b16 %v285, %v285
    %v302 = vpack.c.b16 %v286, %v286
    %v303 = vpack.c.b16 %v287, %v287
    %v304 = vpack.c.b16 %v288, %v288
    %v305 = vpack.c.b16 %v289, %v289
    %v306 = vpack.c.b16 %v290, %v290
    %v307 = vpack.c.b16 %v291, %v291
    %v308 = vpack.c.b16 %v292, %v292
    %v309 = vpack.c.b16 %v293, %v293
    %v310 = vpack.c.b16 %v294, %v294
    %v311 = vpack.c.b16 %v295, %v295
    %v312 = vpack.c.b16 %v296, %v296
    %v313 = vpack.c.b16 %v297, %v297
    %330 = vst [vmem:[#allocation7] sm:$0xf] %v298
    %331 = vst [vmem:[#allocation7 + $0x4] sm:$0xf] %v299
    %332 = vst [vmem:[#allocation7 + $0x8] sm:$0xf] %v300
    %333 = vst [vmem:[#allocation7 + $0xc] sm:$0xf] %v301
    %334 = vst [vmem:[#allocation7 + $0x10] sm:$0xf] %v302
    %335 = vst [vmem:[#allocation7 + $0x14] sm:$0xf] %v303
    %336 = vst [vmem:[#allocation7 + $0x18] sm:$0xf] %v304
    %337 = vst [vmem:[#allocation7 + $0x1c] sm:$0xf] %v305
    %338 = vst [vmem:[#allocation7 + $0x20] sm:$0xf] %v306
    %339 = vst [vmem:[#allocation7 + $0x24] sm:$0xf] %v307
    %340 = vst [vmem:[#allocation7 + $0x28] sm:$0xf] %v308
    %341 = vst [vmem:[#allocation7 + $0x2c] sm:$0xf] %v309
    %342 = vst [vmem:[#allocation7 + $0x30] sm:$0xf] %v310
    %343 = vst [vmem:[#allocation7 + $0x34] sm:$0xf] %v311
    %344 = vst [vmem:[#allocation7 + $0x38] sm:$0xf] %v312
    %345 = vst [vmem:[#allocation7 + $0x3c] sm:$0xf] %v313
    // Predicated region
    $region18: #{tpu_custom_call.1} parent=1 // pred_check
      _
    $region19: #{tpu_custom_call.1} parent=1 // pred_check_branch
      %347 = sbr.rel (0) target = $region21
    $region20: #{tpu_custom_call.1} parent=1 // pred_region
      %s349 = ssub.s32 1024, 1024
      %350 = vsyncadd [#allocation4], %s349
      %s351 = sshll.u32 [#allocation7], 4
      %s352 = int_to_ptr.vmem [resolvable:$true] %s351
      %357 = dma.vmem_to_hbm [thread:$0]  %s352, 1024, %s2, [#allocation4], 64, 64, 4
    $region21: #{tpu_custom_call.1} parent=1 // pred_fallthru
      _
    // Predicated region
    $region22: #{tpu_custom_call.1} parent=1 // pred_check
      _
    $region23: #{tpu_custom_call.1} parent=1 // pred_check_branch
      %359 = sbr.rel (0) target = $region25
    $region24: #{tpu_custom_call.1} parent=1 // pred_region
      %360 = dma.done [#allocation4], 1024
    $region25: #{tpu_custom_call.1} parent=1 // pred_fallthru
      _
    %361 = vsyncpa [#allocation3], 1
    %362 = vsyncpa [#allocation6], 1
    %363 = vsyncpa [#allocation4], 1

</llo_original>
